<compile_context>
chip_gen: v6e
topology: v6e:2x2x1
jax: 0.10.0
libtpu: 0.0.40
codegen_flags: <defaults>
</compile_context>

<pallas_src>
import functools

import jax
import jax.numpy as jnp
from jax.experimental import pallas as pl
from jax.experimental.pallas import tpu as pltpu


def _contrastive_loss_kernel(x_ref, y_ref, lab_ref, out_ref, *, margin, eps, batch):
    i = pl.program_id(0)

    x = x_ref[...].astype(jnp.float32)          # (TB, D)
    y = y_ref[...].astype(jnp.float32)          # (TB, D)
    lab = lab_ref[...].astype(jnp.float32)      # (TB, 1)

    # Per-row cosine similarity (torch.nn.functional.cosine_similarity, dim=1):
    #   cos = dot / max(||x|| * ||y||, eps)
    dot = jnp.sum(x * y, axis=-1, keepdims=True)       # (TB, 1)
    sxx = jnp.sum(x * x, axis=-1, keepdims=True)       # (TB, 1)
    syy = jnp.sum(y * y, axis=-1, keepdims=True)       # (TB, 1)
    denom = jnp.maximum(jnp.sqrt(sxx) * jnp.sqrt(syy), eps)
    cos = dot / denom                                   # (TB, 1)

    # Contrastive loss terms.
    pos = jnp.maximum(cos - margin, 0.0)                # clamp(cos - m, min=0)
    per_row = (1.0 - lab) * pos * pos + lab * (1.0 - cos) * (1.0 - cos)

    # Mask padded tail rows of the (possibly ragged) last block via a select,
    # so uninitialized / NaN garbage in out-of-bounds rows cannot leak in.
    tb = per_row.shape[0]
    row_ids = i * tb + jax.lax.broadcasted_iota(jnp.int32, (tb, 1), 0)
    masked = jnp.where(row_ids < batch, per_row, 0.0)

    # One scalar partial sum per tile -> SMEM (no lane-sparse VMEM writeback).
    out_ref[0, 0] = jnp.sum(masked)


def contrastive_loss(outputs1, outputs2, labels, margin=0.5, eps=1e-8,
                     block_rows=None):
    """Pallas TPU implementation of ContrastiveLoss.forward."""
    B, D = outputs1.shape
    itemsize = jnp.dtype(outputs1.dtype).itemsize
    b_ceil8 = ((B + 7) // 8) * 8

    # Per-generation VMEM capacity (v5e/v6e: 128 MiB, v7x: 64 MiB per TC).
    try:
        vmem_bytes = int(pltpu.get_tpu_info().vmem_capacity_bytes)
    except Exception:  # interpret mode / older runtimes
        vmem_bytes = 64 * 1024 * 1024

    if block_rows is None:
        # Budget: quarter of physical VMEM, capped at 24 MiB.  Per-row footprint
        # counts the double-buffered wire-dtype input tiles (2 inputs x 2 bufs),
        # the in-kernel f32 upcast temporaries (~3 f32 copies), and the
        # lane-padded labels block (2 bufs x 128 lanes x 4 B).
        budget = min(vmem_bytes // 4, 24 * 1024 * 1024)
        per_row_bytes = D * (4 * itemsize + 3 * 4) + 2 * 128 * 4
        tb = budget // per_row_bytes
        tb = (tb // 8) * 8
        tb = max(8, min(1024, tb))
    else:
        tb = max(8, ((block_rows + 7) // 8) * 8)

    # v7x megacore: guarantee >= 2 grid tiles (when the batch allows) so the
    # "parallel" batch axis shards across both TensorCores; free elsewhere.
    if b_ceil8 >= 16:
        tb = min(tb, max(8, ((b_ceil8 // 2) // 8) * 8))
    tb = min(tb, b_ceil8)

    g = pl.cdiv(B, tb)

    # Labels are tiny (B elements); reshape/upcast cost is negligible.
    lab = labels.reshape(B, 1).astype(jnp.float32)

    kernel = functools.partial(
        _contrastive_loss_kernel, margin=margin, eps=eps, batch=B)

    cost = pl.CostEstimate(
        flops=8 * B * D,
        transcendentals=2 * B,
        bytes_accessed=2 * B * D * itemsize + B * 4 + g * 4,
    )

    partials = pl.pallas_call(
        kernel,
        out_shape=jax.ShapeDtypeStruct((g, 1), jnp.float32),
        grid=(g,),
        in_specs=[
            pl.BlockSpec((tb, D), lambda i: (i, 0)),
            pl.BlockSpec((tb, D), lambda i: (i, 0)),
            pl.BlockSpec((tb, 1), lambda i: (i, 0)),
        ],
        out_specs=pl.BlockSpec((1, 1), lambda i: (i, 0),
                               memory_space=pltpu.SMEM),
        compiler_params=pltpu.CompilerParams(
            dimension_semantics=("parallel",),
            vmem_limit_bytes=int(min(vmem_bytes // 2, 64 * 1024 * 1024)),
        ),
        cost_estimate=cost,
    )(outputs1, outputs2, lab)

    # Tiny final reduction over g per-tile partial sums; divide by true B.
    return jnp.sum(partials) / B


def _reference(outputs1, outputs2, labels, margin=0.5, eps=1e-8):
    x = outputs1.astype(jnp.float32)
    y = outputs2.astype(jnp.float32)
    dot = jnp.sum(x * y, axis=1)
    denom = jnp.maximum(jnp.linalg.norm(x, axis=1) * jnp.linalg.norm(y, axis=1), eps)
    cos = dot / denom
    lab = labels.astype(jnp.float32)
    return jnp.mean(
        (1.0 - lab) * jnp.maximum(cos - margin, 0.0) ** 2 + lab * (1.0 - cos) ** 2
    )


if __name__ == "__main__":
    key = jax.random.PRNGKey(0)
    ks = jax.random.split(key, 9)

    # Case 1: small aligned batch, single tile (typical embedding use).
    B, D = 8, 32
    o1 = jax.random.normal(ks[0], (B, D), dtype=jnp.float32)
    o2 = jax.random.normal(ks[1], (B, D), dtype=jnp.float32)
    lb = jax.random.bernoulli(ks[2], 0.5, (B,)).astype(jnp.float32)
    loss = jax.block_until_ready(contrastive_loss(o1, o2, lb, margin=0.5))
    ref = _reference(o1, o2, lb, margin=0.5)
    assert jnp.allclose(loss, ref, atol=1e-5, rtol=1e-5), (loss, ref)

    # Case 2: explicit block_rows, multi-tile grid with a ragged last block
    # (40 % 16 != 0) and NO wrapper-side input padding.
    B2, D2 = 40, 128
    o1b = jax.random.normal(ks[3], (B2, D2), dtype=jnp.float32)
    o2b = jax.random.normal(ks[4], (B2, D2), dtype=jnp.float32)
    lbb = jax.random.bernoulli(ks[5], 0.5, (B2,)).astype(jnp.float32)
    loss2 = jax.block_until_ready(
        contrastive_loss(o1b, o2b, lbb, margin=0.5, block_rows=16))
    ref2 = _reference(o1b, o2b, lbb, margin=0.5)
    assert jnp.allclose(loss2, ref2, atol=1e-5, rtol=1e-5), (loss2, ref2)

    # Case 3: auto heuristic + megacore split (>=2 tiles) + ragged last block.
    B3, D3 = 20, 64
    o1c = jax.random.normal(ks[6], (B3, D3), dtype=jnp.float32)
    o2c = jax.random.normal(ks[7], (B3, D3), dtype=jnp.float32)
    lbc = jax.random.bernoulli(ks[8], 0.5, (B3,)).astype(jnp.float32)
    loss3 = jax.block_until_ready(contrastive_loss(o1c, o2c, lbc, margin=0.5))
    ref3 = _reference(o1c, o2c, lbc, margin=0.5)
    assert jnp.allclose(loss3, ref3, atol=1e-5, rtol=1e-5), (loss3, ref3)

    print("KERNEL_OK")
</pallas_src>

<mosaic_0001>
module attributes {stable_mosaic.version = 11 : i64} {
  func.func @_contrastive_loss_kernel(%arg0: i32, %arg1: memref<8x32xf32, #tpu.memory_space<vmem>>, %arg2: memref<8x32xf32, #tpu.memory_space<vmem>>, %arg3: memref<8x1xf32, #tpu.memory_space<vmem>>, %arg4: memref<1x1xf32, #tpu.memory_space<smem>>) attributes {dimension_semantics = [#tpu.dimension_semantics<parallel>], iteration_bounds = array<i64: 1>, scalar_prefetch = 0 : i64, scratch_operands = 0 : i64, tpu.core_type = #tpu.core_type<tc>, window_params = [{transform_indices = @transform_0, window_bounds = array<i64: 8, 32>}, {transform_indices = @transform_1, window_bounds = array<i64: 8, 32>}, {transform_indices = @transform_2, window_bounds = array<i64: 8, 1>}, {transform_indices = @transform_3, window_bounds = array<i64: 1, 1>}]} {
    %c0 = arith.constant 0 : index
    %c0_0 = arith.constant 0 : index
    %0 = vector.load %arg1[%c0, %c0_0] : memref<8x32xf32, #tpu.memory_space<vmem>>, vector<8x32xf32>
    %c0_1 = arith.constant 0 : index
    %c0_2 = arith.constant 0 : index
    %1 = vector.load %arg2[%c0_1, %c0_2] : memref<8x32xf32, #tpu.memory_space<vmem>>, vector<8x32xf32>
    %c0_3 = arith.constant 0 : index
    %c0_4 = arith.constant 0 : index
    %2 = vector.load %arg3[%c0_3, %c0_4] : memref<8x1xf32, #tpu.memory_space<vmem>>, vector<8x1xf32>
    %3 = arith.mulf %0, %1 : vector<8x32xf32>
    %cst = arith.constant dense<0.000000e+00> : vector<8xf32>
    %4 = vector.multi_reduction <add>, %3, %cst [1] : vector<8x32xf32> to vector<8xf32>
    %5 = vector.shape_cast %4 : vector<8xf32> to vector<8x1xf32>
    %6 = arith.mulf %0, %0 : vector<8x32xf32>
    %cst_5 = arith.constant dense<0.000000e+00> : vector<8xf32>
    %7 = vector.multi_reduction <add>, %6, %cst_5 [1] : vector<8x32xf32> to vector<8xf32>
    %8 = vector.shape_cast %7 : vector<8xf32> to vector<8x1xf32>
    %9 = arith.mulf %1, %1 : vector<8x32xf32>
    %cst_6 = arith.constant dense<0.000000e+00> : vector<8xf32>
    %10 = vector.multi_reduction <add>, %9, %cst_6 [1] : vector<8x32xf32> to vector<8xf32>
    %11 = vector.shape_cast %10 : vector<8xf32> to vector<8x1xf32>
    %12 = math.sqrt %8 : vector<8x1xf32>
    %13 = math.sqrt %11 : vector<8x1xf32>
    %14 = arith.mulf %12, %13 : vector<8x1xf32>
    %cst_7 = arith.constant 9.99999993E-9 : f32
    %15 = vector.broadcast %cst_7 : f32 to vector<8x1xf32>
    %16 = arith.maximumf %14, %15 : vector<8x1xf32>
    %17 = arith.divf %5, %16 : vector<8x1xf32>
    %cst_8 = arith.constant 5.000000e-01 : f32
    %18 = vector.broadcast %cst_8 : f32 to vector<8x1xf32>
    %19 = arith.subf %17, %18 : vector<8x1xf32>
    %cst_9 = arith.constant 0.000000e+00 : f32
    %20 = vector.broadcast %cst_9 : f32 to vector<8x1xf32>
    %21 = arith.maximumf %19, %20 : vector<8x1xf32>
    %cst_10 = arith.constant 1.000000e+00 : f32
    %22 = vector.broadcast %cst_10 : f32 to vector<8x1xf32>
    %23 = arith.subf %22, %2 : vector<8x1xf32>
    %24 = arith.mulf %23, %21 : vector<8x1xf32>
    %25 = arith.mulf %24, %21 : vector<8x1xf32>
    %cst_11 = arith.constant 1.000000e+00 : f32
    %26 = vector.broadcast %cst_11 : f32 to vector<8x1xf32>
    %27 = arith.subf %26, %17 : vector<8x1xf32>
    %28 = arith.mulf %2, %27 : vector<8x1xf32>
    %cst_12 = arith.constant 1.000000e+00 : f32
    %29 = vector.broadcast %cst_12 : f32 to vector<8x1xf32>
    %30 = arith.subf %29, %17 : vector<8x1xf32>
    %31 = arith.mulf %28, %30 : vector<8x1xf32>
    %32 = arith.addf %25, %31 : vector<8x1xf32>
    %c8_i32 = arith.constant 8 : i32
    %33 = arith.muli %arg0, %c8_i32 : i32
    %34 = tpu.iota {dimensions = array<i32: 0>} : vector<8x1xi32>
    %35 = vector.broadcast %33 : i32 to vector<8x1xi32>
    %36 = arith.addi %35, %34 : vector<8x1xi32>
    %c8_i32_13 = arith.constant 8 : i32
    %37 = vector.broadcast %c8_i32_13 : i32 to vector<8x1xi32>
    %38 = arith.cmpi slt, %36, %37 : vector<8x1xi32>
    %cst_14 = arith.constant 0.000000e+00 : f32
    %39 = vector.broadcast %cst_14 : f32 to vector<8x1xf32>
    %40 = arith.select %38, %32, %39 : vector<8x1xi1>, vector<8x1xf32>
    %41 = vector.shape_cast %40 : vector<8x1xf32> to vector<1x8x1xf32>
    %cst_15 = arith.constant dense<0.000000e+00> : vector<1xf32>
    %42 = vector.multi_reduction <add>, %41, %cst_15 [1, 2] : vector<1x8x1xf32> to vector<1xf32>
    %43 = vector.shape_cast %42 : vector<1xf32> to vector<1x1x1xf32>
    %44 = vector.extract %43[0, 0, 0] : f32 from vector<1x1x1xf32>
    %c0_16 = arith.constant 0 : index
    %c0_17 = arith.constant 0 : index
    %45 = memref.load %arg4[%c0_16, %c0_17] : memref<1x1xf32, #tpu.memory_space<smem>>
    memref.store %44, %arg4[%c0_16, %c0_17] : memref<1x1xf32, #tpu.memory_space<smem>>
    return
  }
  func.func @transform_0(%arg0: i32) -> (i32, i32) {
    %c0_i32 = arith.constant 0 : i32
    %c0_i32_0 = arith.constant 0 : i32
    return %arg0, %c0_i32 : i32, i32
  }
  func.func @transform_1(%arg0: i32) -> (i32, i32) {
    %c0_i32 = arith.constant 0 : i32
    %c0_i32_0 = arith.constant 0 : i32
    return %arg0, %c0_i32 : i32, i32
  }
  func.func @transform_2(%arg0: i32) -> (i32, i32) {
    %c0_i32 = arith.constant 0 : i32
    %c0_i32_0 = arith.constant 0 : i32
    return %arg0, %c0_i32 : i32, i32
  }
  func.func @transform_3(%arg0: i32) -> (i32, i32) {
    %c0_i32 = arith.constant 0 : i32
    %c0_i32_0 = arith.constant 0 : i32
    return %arg0, %c0_i32 : i32, i32
  }
}

</mosaic_0001>

<llo_original>
// kernel: tpu_custom_call.1
$region0: #{tpu_custom_call.1}
  #allocation0 [shape = 'u32[]', space=smem, size = 0x4, offset = 0x4, fixed_abs, tag = 'smem constant byte address 0x4 - core index']
  #allocation1 [shape = 'u32[144,128]{1,0:T(1,128)}', space=vmem, size = 0x12000, scoped, tag = 'internal scratch']
  %s0 = inlined_call_operand.vmem [shape: f32[8,32], index: 0, kind: input, shape index: {}]
  %s1 = inlined_call_operand.hbm [shape: f32[8,32], index: 1, kind: input, shape index: {}]
  %s2 = inlined_call_operand.vmem [shape: f32[8,1], index: 2, kind: input, shape index: {}]
  %s3 = inlined_call_operand.hbm [shape: f32[1,1], index: 3, kind: output, shape index: {}]
  %s4 = sld [smem:[#allocation0]]
  $region26: #{tpu_custom_call.1} parent=0
    _
  %s6 = ssub.s32 1, %s4
  %s7 = scalar_select 0, %s6, %s4
  $region1: #{tpu_custom_call.1} parent=0
    #allocation2 [shape = 'u8[4096]{0}', space=vmem, size = 0x1000, scoped, tag = 'input window, operand 1, single buffered']
    #allocation3 [shape = 's32[1]{0}', space=sflag, size = 0x4, scoped, tag = 'scoped memory for tpu_custom_call.1']
    #allocation4 [shape = 's32[1]{0}', space=sflag, size = 0x4, scoped, tag = 'scoped memory for tpu_custom_call.1']
    #allocation5 [shape = 'u8[512]{0}', space=smem, size = 0x200, scoped, tag = 'output window, operand 0, single buffered']
    %8 = vsyncpa [#allocation3], 0
    %9 = vsyncpa [#allocation4], 0
    // Predicated region
    $region2: #{tpu_custom_call.1} parent=1 // pred_check
      _
    $region3: #{tpu_custom_call.1} parent=1 // pred_check_branch
      %11 = sbr.rel (0) target = $region5
    $region4: #{tpu_custom_call.1} parent=1 // pred_region
      _
    $region5: #{tpu_custom_call.1} parent=1 // pred_fallthru
      _
    // Predicated region
    $region6: #{tpu_custom_call.1} parent=1 // pred_check
      _
    $region7: #{tpu_custom_call.1} parent=1 // pred_check_branch
      %13 = sbr.rel (0) target = $region9
    $region8: #{tpu_custom_call.1} parent=1 // pred_region
      %s15 = ssub.s32 128, 128
      %16 = vsyncadd [#allocation3], %s15
      %s18 = sshll.u32 [#allocation2], 4
      %s19 = int_to_ptr.vmem [resolvable:$true] %s18
      %21 = dma.hbm_to_vmem [thread:$0]  %s1, 128, %s19, [#allocation3]
    $region9: #{tpu_custom_call.1} parent=1 // pred_fallthru
      _
    // Predicated region
    $region10: #{tpu_custom_call.1} parent=1 // pred_check
      _
    $region11: #{tpu_custom_call.1} parent=1 // pred_check_branch
      %23 = sbr.rel (0) target = $region13
    $region12: #{tpu_custom_call.1} parent=1 // pred_region
      _
    $region13: #{tpu_custom_call.1} parent=1 // pred_fallthru
      _
    // Predicated region
    $region14: #{tpu_custom_call.1} parent=1 // pred_check
      _
    $region15: #{tpu_custom_call.1} parent=1 // pred_check_branch
      %25 = sbr.rel (0) target = $region17
    $region16: #{tpu_custom_call.1} parent=1 // pred_region
      %26 = dma.done [#allocation3], 128
    $region17: #{tpu_custom_call.1} parent=1 // pred_fallthru
      _
    %v27 = vld [vmem:[%s0] sm:$0xff]
    %v28 = vld [vmem:[#allocation2] sm:$0xff]
    %v29 = vld [vmem:[%s2] sm:$0xff]
    %v30 = vmul.f32 %v27, %v28
    %vm31 = vcmask 261120
    %v32 = vsel %vm31, %v30, 0.0
    %33 = vadd.xlane.f32.xlu0 %v32
    %v34 = vpop.xlane.xlu0 %33
    %v35 = vmul.f32 %v27, %v27
    %v36 = vsel %vm31, %v35, 0.0
    %37 = vadd.xlane.f32.xlu0 %v36
    %v38 = vpop.xlane.xlu0 %37
    %v39 = vmul.f32 %v28, %v28
    %v40 = vsel %vm31, %v39, 0.0
    %41 = vadd.xlane.f32.xlu0 %v40
    %v42 = vpop.xlane.xlu0 %41
    %v43 = vrsqrt.pop %v38
    %v44 = vmul.f32 %v38, %v43
    %vm45 = vcmp.eq.f32.partialorder %v38, inf
    %v46 = vsel %vm45, %v38, %v44
    %vm47 = vcmp.eq.f32.partialorder %v38, 0.0
    %v48 = vand.u32 %v38, 2147483648
    %v49 = vsel %vm47, %v48, %v46
    %v50 = vrsqrt.pop %v42
    %v51 = vmul.f32 %v42, %v50
    %vm52 = vcmp.eq.f32.partialorder %v42, inf
    %v53 = vsel %vm52, %v42, %v51
    %vm54 = vcmp.eq.f32.partialorder %v42, 0.0
    %v55 = vand.u32 %v42, 2147483648
    %v56 = vsel %vm54, %v55, %v53
    %v57 = vmul.f32 %v49, %v56
    %v58 = vmax.f32 %v57, 1e-08
    %v59 = vrcp.pop %v58
    %v60 = vmul.f32 %v34, %v59
    %v61 = vsub.f32 %v60, 0.5
    %v62 = vmax.f32 %v61, 0.0
    %v63 = vsub.f32 1.0, %v29
    %v64 = vmul.f32 %v63, %v62
    %v65 = vmul.f32 %v64, %v62
    %v66 = vsub.f32 1.0, %v60
    %v67 = vmul.f32 %v29, %v66
    %v68 = vmul.f32 %v67, %v66
    %v69 = vadd.f32 %v65, %v68
    %s70 = smul.u32 0, 8
    %v71 = vlaneseq
    %v72 = vshrl.u32 %v71, 7
    %v73 = vstv %s70
    %v74 = vadd.s32 %v73, %v72
    %vm75 = vcmp.lt.s32.totalorder %v74, 8
    %v76 = vsel %vm75, %v69, 0.0
    %vm77 = vcmask 7168
    %v78 = vsel %vm77, %v76, 0.0
    %79 = vadd.xlane.f32.xlu0 %v78
    %v80 = vpop.xlane.xlu0 %79
    %v81 = vrot.slane %v80, 4
    %v82 = vadd.f32 %v80, %v81
    %v83 = vrot.slane %v82, 2
    %v84 = vadd.f32 %v82, %v83
    %v85 = vrot.slane %v84, 1
    %v86 = vadd.f32 %v84, %v85
    %s87 = vtos %v86
    %s88 = scalar_lea.smem [#allocation5], 0
    %89 = sst [smem:[%s88]] %s87
    // Predicated region
    $region18: #{tpu_custom_call.1} parent=1 // pred_check
      _
    $region19: #{tpu_custom_call.1} parent=1 // pred_check_branch
      %91 = sbr.rel (0) target = $region21
    $region20: #{tpu_custom_call.1} parent=1 // pred_region
      %s93 = ssub.s32 16, 16
      %94 = vsyncadd [#allocation4], %s93
      %97 = dma.smem_to_hbm [#allocation5], 16, %s3, [#allocation4]
    $region21: #{tpu_custom_call.1} parent=1 // pred_fallthru
      _
    // Predicated region
    $region22: #{tpu_custom_call.1} parent=1 // pred_check
      _
    $region23: #{tpu_custom_call.1} parent=1 // pred_check_branch
      %99 = sbr.rel (0) target = $region25
    $region24: #{tpu_custom_call.1} parent=1 // pred_region
      %100 = dma.done [#allocation4], 16
    $region25: #{tpu_custom_call.1} parent=1 // pred_fallthru
      _
    %101 = sfence
    %102 = vsyncpa [#allocation3], 1
    %103 = vsyncpa [#allocation4], 1

</llo_original>
